<compile_context>
chip_gen: v5e
topology: v5e:2x2
jax: 0.10.0
libtpu: 0.0.40
codegen_flags: <defaults>
</compile_context>

<pallas_src>
import functools

import jax
import jax.numpy as jnp
from jax.experimental import pallas as pl
from jax.experimental.pallas import tpu as pltpu

_FALLBACK_LANES = 512      # flat lane width when no trailing dim is 128-aligned
_MAX_LANE_WIDTH = 32768    # cap so even a minimum-height tile stays a few MiB
_MIN_PALLAS_ELEMS = 65536  # below this (~256 KiB f32) a fused jnp.where wins


def _cdiv(a, b):
    return -(-a // b)


def _round_up(x, m):
    return _cdiv(x, m) * m


@functools.lru_cache(maxsize=1)
def _device_tuning():
    """Returns (target in+out bytes per grid step, vmem_limit_bytes)."""
    try:
        kind = jax.devices()[0].device_kind.lower()
    except Exception:
        kind = ""
    if "v7" in kind or "tpu7" in kind:
        # v7x: 3.2 TB/s HBM makes the ~0.35 us/step overhead visible; bigger
        # tiles.  Double-buffered live VMEM = 2 x 16 = 32 MiB < 48 MiB limit,
        # well under the 64 MiB physical VMEM per TC.
        return 16 * 1024 * 1024, 48 * 1024 * 1024
    # v5e / v6e: 8 MiB/step (16 MiB live) already sits at ~86% of roofline.
    return 8 * 1024 * 1024, 32 * 1024 * 1024


def _threshold_kernel(x_ref, o_ref):
    x = x_ref[...]
    if jnp.issubdtype(o_ref.dtype, jnp.floating):
        # Exact PyTorch masked-assignment semantics: NaN stays NaN.
        o_ref[...] = jnp.where(
            x >= 0.5, jnp.ones_like(x),
            jnp.where(x < 0.5, jnp.zeros_like(x), x)).astype(o_ref.dtype)
    else:
        # Integer outputs (e.g. uint8): plain threshold, 4x less store traffic.
        o_ref[...] = (x >= 0.5).astype(o_ref.dtype)


def _binarize_ref(x, out_dtype):
    """Pure-JAX fallback with identical semantics (tiny volumes)."""
    if jnp.issubdtype(jnp.dtype(out_dtype), jnp.floating):
        y = jnp.where(x >= 0.5, jnp.ones_like(x),
                      jnp.where(x < 0.5, jnp.zeros_like(x), x))
        return y.astype(out_dtype)
    return (x >= 0.5).astype(out_dtype)


def _choose_lane_width(shape):
    """Pick a lane-dense width that avoids padding whenever possible."""
    if len(shape) >= 1 and shape[-1] % 128 == 0 and shape[-1] <= _MAX_LANE_WIDTH:
        return shape[-1]
    if len(shape) >= 2:
        hw = shape[-2] * shape[-1]
        if hw % 128 == 0 and hw <= _MAX_LANE_WIDTH:
            return hw
    return _FALLBACK_LANES


def _choose_tile_rows(rows, lane_width, in_dtype, out_dtype, target_tile_bytes):
    in_b = jnp.dtype(in_dtype).itemsize
    out_b = jnp.dtype(out_dtype).itemsize
    # Sublane alignment: f32 -> 8, bf16 -> 16, (u)int8 -> 32 (packed layouts).
    align = max(8 * (4 // in_b), 8 * (4 // out_b), 8)
    bytes_per_row = lane_width * (in_b + out_b)
    max_rows = max(align, (target_tile_bytes // bytes_per_row) // align * align)
    if max_rows >= rows:
        if rows > 2 * align:
            # Keep >= 2 grid steps so dimension_semantics=("parallel",) can
            # split the stream across both v7x TensorCores.
            return _round_up(_cdiv(rows, 2), align)
        return rows            # single full-extent block (always legal)
    return max_rows


def binarize_volume(vol, out_dtype=None, *, force_pallas=False, donate=False):
    """Elementwise threshold of `vol` at 0.5 -> {0, 1}, preserving shape.

    NaN is preserved for float outputs (matching the reference's masked
    assignments).  Pass out_dtype=jnp.uint8 to quarter the store traffic
    (values are exactly {0, 1}); pass donate=True (with a donated input under
    jit) to alias the output onto the input HBM buffer.
    """
    if out_dtype is None:
        out_dtype = vol.dtype
    out_dtype = jnp.dtype(out_dtype)
    orig_shape = vol.shape
    n = vol.size
    if n == 0:
        return jnp.zeros(orig_shape, out_dtype)
    if not force_pallas and n < _MIN_PALLAS_ELEMS:
        # Custom-call launch overhead dominates for tiny volumes.
        return _binarize_ref(vol, out_dtype)

    lane_width = _choose_lane_width(orig_shape)
    pad = (-n) % lane_width
    if pad:
        # Rare path (no 128-multiple trailing dims): pad only the short tail,
        # never round_up(rows, tile_rows) — the grid handles a ragged last
        # block.
        flat = jnp.pad(vol.reshape(-1), (0, pad))
    else:
        flat = vol.reshape(-1)
    rows = (n + pad) // lane_width
    x2d = flat.reshape(rows, lane_width)

    target_tile_bytes, vmem_limit = _device_tuning()
    tile_rows = _choose_tile_rows(rows, lane_width, vol.dtype, out_dtype,
                                  target_tile_bytes)
    grid = (_cdiv(rows, tile_rows),)

    aliases = {0: 0} if (donate and out_dtype == x2d.dtype) else {}

    out2d = pl.pallas_call(
        _threshold_kernel,
        out_shape=jax.ShapeDtypeStruct((rows, lane_width), out_dtype),
        grid_spec=pl.GridSpec(
            grid=grid,
            in_specs=[pl.BlockSpec((tile_rows, lane_width), lambda i: (i, 0))],
            out_specs=pl.BlockSpec((tile_rows, lane_width), lambda i: (i, 0)),
        ),
        compiler_params=pltpu.CompilerParams(
            dimension_semantics=("parallel",),
            vmem_limit_bytes=vmem_limit,
        ),
        input_output_aliases=aliases,
    )(x2d)

    out = out2d.reshape(-1)
    if pad:
        out = out[:n]
    return out.reshape(orig_shape)


def write_nifti_forward(val_inputs, val_labels_, val_outputs_,
                        pred_dtype=jnp.float32):
    """Numeric portion of WriteNifti.forward() for the to_onehot == 1 branch.

    val_inputs:   (B, C_in,  D, H, W)
    val_labels_:  (B, C_lab, D, H, W)
    val_outputs_: (B, C_out, D, H, W), C_out >= 2 (channel [0][1] is binarized)

    Returns (inputs_vol, labels_vol, pred_vol), each (D, H, W).  pred_dtype
    defaults to float32 to match the reference's in-place float mutation; pass
    jnp.uint8 to cut the kernel's store traffic 4x and cast in the host-side
    NIfTI writer instead.
    """
    inputs_vol = val_inputs[0, 0]
    labels_vol = val_labels_[0, 0]
    pred_vol = binarize_volume(val_outputs_[0, 1], out_dtype=pred_dtype)
    # TODO(synk): the to_onehot != 1 branch and SaveImage(.nii.gz) host I/O are
    #             not representable in Pallas and are intentionally omitted.
    return inputs_vol, labels_vol, pred_vol


if __name__ == "__main__":
    key = jax.random.PRNGKey(0)
    k1, k2, k3, k4, k5 = jax.random.split(key, 5)

    # Shapes sized so the prediction volume (16*32*256 = 131072 elements) takes
    # the Pallas path while staying small and fast.
    B, C, D, H, W = 2, 2, 16, 32, 256
    val_inputs = jax.random.normal(k1, (B, 1, D, H, W), dtype=jnp.float32)
    val_labels_ = (jax.random.uniform(k2, (B, 1, D, H, W)) > 0.5).astype(jnp.float32)
    val_outputs_ = jax.random.uniform(k3, (B, C, D, H, W), dtype=jnp.float32)

    inputs_vol, labels_vol, pred_vol = write_nifti_forward(
        val_inputs, val_labels_, val_outputs_
    )
    jax.block_until_ready(pred_vol)

    ref = jnp.where(val_outputs_[0, 1] >= 0.5, 1.0, 0.0)
    assert pred_vol.shape == (D, H, W) and pred_vol.dtype == jnp.float32
    assert bool(jnp.all(pred_vol == ref))
    assert inputs_vol.shape == (D, H, W) and labels_vol.shape == (D, H, W)

    # uint8 output path (4x less store traffic); host NIfTI writer would cast.
    pred_u8 = binarize_volume(val_outputs_[0, 1], out_dtype=jnp.uint8)
    jax.block_until_ready(pred_u8)
    assert pred_u8.dtype == jnp.uint8
    assert bool(jnp.all(pred_u8.astype(jnp.float32) == ref))

    # Tail-pad + ragged-grid path (no 128-multiple trailing dims).
    odd = jax.random.uniform(k4, (17, 61, 67), dtype=jnp.float32)
    odd_out = binarize_volume(odd, force_pallas=True)
    jax.block_until_ready(odd_out)
    assert bool(jnp.all(odd_out == jnp.where(odd >= 0.5, 1.0, 0.0)))

    # H*W lane-width path (W not a multiple of 128, H*W is).
    hw = jax.random.uniform(k5, (12, 64, 96), dtype=jnp.float32)
    hw_out = binarize_volume(hw, force_pallas=True)
    jax.block_until_ready(hw_out)
    assert bool(jnp.all(hw_out == jnp.where(hw >= 0.5, 1.0, 0.0)))

    # NaN preservation (matches PyTorch masked-assignment semantics): tiny
    # jnp.where fallback and the kernel path on an (8, 128) tile.
    small = jnp.array([[0.5, 0.49, jnp.nan, 1.0]] * 2, dtype=jnp.float32)
    small_out = binarize_volume(small)                                   # fallback
    small_out_k = binarize_volume(jnp.tile(small, (4, 32)), force_pallas=True)
    jax.block_until_ready((small_out, small_out_k))
    assert bool(small_out[0, 0] == 1.0) and bool(small_out[0, 1] == 0.0)
    assert bool(jnp.isnan(small_out[0, 2]))
    assert bool(jnp.isnan(small_out_k[0, 2]))
    assert bool(jnp.all(small_out_k[:, :2] == jnp.array([1.0, 0.0])))

    print("KERNEL_OK")
</pallas_src>

<mosaic_0001>
module attributes {stable_mosaic.version = 11 : i64} {
  func.func @_threshold_kernel(%arg0: i32, %arg1: memref<256x256xf32, #tpu.memory_space<vmem>>, %arg2: memref<256x256xf32, #tpu.memory_space<vmem>>) attributes {dimension_semantics = [#tpu.dimension_semantics<parallel>], iteration_bounds = array<i64: 2>, scalar_prefetch = 0 : i64, scratch_operands = 0 : i64, tpu.core_type = #tpu.core_type<tc>, window_params = [{transform_indices = @transform_0, window_bounds = array<i64: 256, 256>}, {transform_indices = @transform_1, window_bounds = array<i64: 256, 256>}]} {
    %c0 = arith.constant 0 : index
    %c0_0 = arith.constant 0 : index
    %0 = vector.load %arg1[%c0, %c0_0] : memref<256x256xf32, #tpu.memory_space<vmem>>, vector<256x256xf32>
    %cst = arith.constant 5.000000e-01 : f32
    %1 = vector.broadcast %cst : f32 to vector<256x256xf32>
    %2 = arith.cmpf oge, %0, %1 : vector<256x256xf32>
    %cst_1 = arith.constant 1.000000e+00 : f32
    %3 = vector.broadcast %cst_1 : f32 to vector<256x256xf32>
    %cst_2 = arith.constant 5.000000e-01 : f32
    %4 = vector.broadcast %cst_2 : f32 to vector<256x256xf32>
    %5 = arith.cmpf olt, %0, %4 : vector<256x256xf32>
    %cst_3 = arith.constant 0.000000e+00 : f32
    %6 = vector.broadcast %cst_3 : f32 to vector<256x256xf32>
    %7 = arith.select %5, %6, %0 : vector<256x256xi1>, vector<256x256xf32>
    %8 = arith.select %2, %3, %7 : vector<256x256xi1>, vector<256x256xf32>
    %c0_4 = arith.constant 0 : index
    %c0_5 = arith.constant 0 : index
    %9 = vector.load %arg2[%c0_4, %c0_5] : memref<256x256xf32, #tpu.memory_space<vmem>>, vector<256x256xf32>
    tpu.vector_store %arg2[%c0_4, %c0_5], %8 {strides = array<i32>} : memref<256x256xf32, #tpu.memory_space<vmem>>, vector<256x256xf32>,
    return
  }
  func.func @transform_0(%arg0: i32) -> (i32, i32) {
    %c0_i32 = arith.constant 0 : i32
    %c0_i32_0 = arith.constant 0 : i32
    return %arg0, %c0_i32 : i32, i32
  }
  func.func @transform_1(%arg0: i32) -> (i32, i32) {
    %c0_i32 = arith.constant 0 : i32
    %c0_i32_0 = arith.constant 0 : i32
    return %arg0, %c0_i32 : i32, i32
  }
}

</mosaic_0001>

<llo_original>
// kernel: tpu_custom_call.1
$region0: #{tpu_custom_call.1}
  #allocation0 [shape = 'u32[]', space=smem, size = 0x4, offset = 0x4, fixed_abs, tag = 'smem constant byte address 0x4 - core index']
  #allocation1 [shape = 'u32[72,128]{1,0:T(1,128)}', space=vmem, size = 0x9000, scoped, tag = 'internal scratch']
  %s0 = inlined_call_operand.hbm [shape: f32[512,256], index: 0, kind: input, shape index: {}]
  %s1 = inlined_call_operand.hbm [shape: f32[512,256], index: 1, kind: output, shape index: {}]
  %s2 = sld [smem:[#allocation0]]
  $region41: #{tpu_custom_call.1} parent=0
    _
  %s4 = ssub.s32 1, %s2
  %s5 = scalar_select 0, %s4, %s2
  $region1: #{tpu_custom_call.1} parent=0
    #allocation2 [shape = 'u8[524288]{0}', space=vmem, size = 0x80000, scoped, tag = 'input window, operand 0']
    #allocation3 [shape = 's32[2]{0}', space=sflag, size = 0x8, scoped, tag = 'scoped memory for tpu_custom_call.1']
    #allocation4 [shape = 's32[2]{0}', space=sflag, size = 0x8, scoped, tag = 'scoped memory for tpu_custom_call.1']
    #allocation5 [shape = 'u8[524288]{0}', space=vmem, size = 0x80000, scoped, tag = 'output window, operand 0']
    %6 = vsyncpa [#allocation3], 0
    %s7 = scalar_lea.sflag [#allocation3], 1
    %8 = vsyncpa %s7, 0
    %9 = vsyncpa [#allocation4], 0
    %s10 = scalar_lea.sflag [#allocation4], 1
    %11 = vsyncpa %s10, 0
    loop: start=0, step=1, limit=4
    $region2: #{tpu_custom_call.1} parent=1 // loop_pre_header
      _
    $region3: #{tpu_custom_call.1} parent=1 // loop_header
      %s13 = sphi 0, %s17
      %p14 = scmp.ge.s32.totalorder %s13, 4
      %s23 = sphi 0, %s25
      %s26 = sphi 0, %s23
      %s27 = sphi 0, %s26
      %s43 = sphi 0, %s27
      %s49 = sphi 0, %s51
      %s52 = sphi 0, %s49
      %s53 = sphi 0, %s52
      %s69 = sphi 0, %s53
    $region4: #{tpu_custom_call.1} parent=1 // loop_header_branch
      %16 = sbr.rel (%p14) target = $region8
    $region5: #{tpu_custom_call.1} parent=1 // loop_body
      %s18 = ssub.s32 %s13, 1
      %s19 = ssub.s32 %s13, 2
      %s20 = sadd.s32 %s13, 1
      %s21 = ssub.s32 %s13, %s20
      %p22 = scmp.eq.s32.totalorder %s21, 0
      %s24 = sadd.s32 %s23, 1
      %s25 = scalar_select %p22, %s23, %s24
      %p28 = pneg %p22
      %p29 = scmp.eq.s32.totalorder %s13, 1
      %p30 = por %p28, %p29
      %p31 = scmp.ne.s32.totalorder %s23, %s26
      %p32 = scmp.eq.s32.totalorder %s13, 0
      %p33 = por %p31, %p32
      %p34 = scmp.ne.s32.totalorder %s23, %s26
      %p35 = scmp.eq.s32.totalorder %s18, 1
      %p36 = por %p34, %p35
      %p37 = scmp.ne.s32.totalorder %s26, %s27
      %p38 = scmp.eq.s32.totalorder %s18, 0
      %p39 = por %p37, %p38
      %p40 = scmp.ne.s32.totalorder %s26, %s27
      %p41 = scmp.eq.s32.totalorder %s19, 1
      %p42 = por %p40, %p41
      %p44 = scmp.ne.s32.totalorder %s27, %s43
      %p45 = scmp.eq.s32.totalorder %s19, 0
      %p46 = por %p44, %p45
      %s47 = ssub.s32 %s13, %s20
      %p48 = scmp.eq.s32.totalorder %s47, 0
      %s50 = sadd.s32 %s49, 1
      %s51 = scalar_select %p48, %s49, %s50
      %p54 = pneg %p48
      %p55 = scmp.eq.s32.totalorder %s13, 1
      %p56 = por %p54, %p55
      %p57 = scmp.ne.s32.totalorder %s49, %s52
      %p58 = scmp.eq.s32.totalorder %s13, 0
      %p59 = por %p57, %p58
      %p60 = scmp.ne.s32.totalorder %s49, %s52
      %p61 = scmp.eq.s32.totalorder %s18, 1
      %p62 = por %p60, %p61
      %p63 = scmp.ne.s32.totalorder %s52, %s53
      %p64 = scmp.eq.s32.totalorder %s18, 0
      %p65 = por %p63, %p64
      %p66 = scmp.ne.s32.totalorder %s52, %s53
      %p67 = scmp.eq.s32.totalorder %s19, 1
      %p68 = por %p66, %p67
      %p70 = scmp.ne.s32.totalorder %s53, %s69
      %p71 = scmp.eq.s32.totalorder %s19, 0
      %p72 = por %p70, %p71
      %p73 = scmp.le.s32.totalorder 1, %s13
      %p74 = scmp.lt.s32.totalorder %s13, 3
      %p75 = pnand %p73, %p74
      %p76 = pneg %p75
      // Predicated region
      $region9: #{tpu_custom_call.1} parent=5 // pred_check
        _
      $region10: #{tpu_custom_call.1} parent=5 // pred_check_branch
        %78 = sbr.rel (%p75) target = $region12
      $region11: #{tpu_custom_call.1} parent=5 // pred_region
        %s79 = ssub.s32 %s13, 1
      $region12: #{tpu_custom_call.1} parent=5 // pred_fallthru
        _
      %p80 = scmp.lt.s32.totalorder %s13, 2
      // Predicated region
      $region13: #{tpu_custom_call.1} parent=5 // pred_check
        %p81 = pneg %p80
      $region14: #{tpu_custom_call.1} parent=5 // pred_check_branch
        %83 = sbr.rel (%p81) target = $region16
      $region15: #{tpu_custom_call.1} parent=5 // pred_region
        // Predicated region
        $region17: #{tpu_custom_call.1} parent=15 // pred_check
          %p84 = pneg %p33
        $region18: #{tpu_custom_call.1} parent=15 // pred_check_branch
          %86 = sbr.rel (%p84) target = $region20
        $region19: #{tpu_custom_call.1} parent=15 // pred_region
          %s87 = sand.u32 %s23, 1
          %s88 = scalar_lea.sflag [#allocation3], %s87
          %s89 = sand.u32 %s23, 1
          %s90 = smul.addr %s89, 512
          %s91 = scalar_lea.vmem [#allocation2], %s90
          %s92 = smul.u32 32, %s13
          %94 = vsyncadd %s88, 0
          %s95 = smul.addr %s92, 2
          %s96 = smul.addr %s95, 8
          %s97 = scalar_lea.hbm %s0, %s96
          %s98 = sshll.u32 %s97, 4
          %s99 = int_to_ptr.hbm [resolvable:$true] %s98
          %s100 = sshll.u32 %s91, 4
          %s101 = int_to_ptr.vmem [resolvable:$true] %s100
          %106 = dma.hbm_to_vmem [thread:$0]  %s99, 8192, %s101, %s88, 256, 256, 16
        $region20: #{tpu_custom_call.1} parent=15 // pred_fallthru
          _
      $region16: #{tpu_custom_call.1} parent=5 // pred_fallthru
        _
      %p107 = scmp.le.s32.totalorder 1, %s13
      %p108 = scmp.lt.s32.totalorder %s13, 3
      %p109 = pnand %p107, %p108
      %p110 = pneg %p109
      // Predicated region
      $region21: #{tpu_custom_call.1} parent=5 // pred_check
        _
      $region22: #{tpu_custom_call.1} parent=5 // pred_check_branch
        %112 = sbr.rel (%p109) target = $region24
      $region23: #{tpu_custom_call.1} parent=5 // pred_region
        %s113 = ssub.s32 %s13, 1
        %s114 = sand.u32 %s26, 1
        %s115 = scalar_lea.sflag [#allocation3], %s114
        %s116 = sand.u32 %s26, 1
        %s117 = smul.addr %s116, 512
        %s118 = scalar_lea.vmem [#allocation2], %s117
        // Predicated region
        $region25: #{tpu_custom_call.1} parent=23 // pred_check
          %p119 = pneg %p39
        $region26: #{tpu_custom_call.1} parent=23 // pred_check_branch
          %121 = sbr.rel (%p119) target = $region28
        $region27: #{tpu_custom_call.1} parent=23 // pred_region
          %123 = dma.done %s115, 8192
        $region28: #{tpu_custom_call.1} parent=23 // pred_fallthru
          _
        %s124 = sand.u32 %s26, 1
        %s125 = scalar_lea.sflag [#allocation3], %s124
        %s126 = sand.u32 %s26, 1
        %s127 = smul.addr %s126, 512
        %s128 = scalar_lea.vmem [#allocation2], %s127
        %p129 = pneg %p39
        %p130 = pneg %p36
        %p131 = pneg %p65
        %p132 = pneg %p62
        %s133 = sand.u32 %s52, 1
        %s134 = scalar_lea.sflag [#allocation4], %s133
        %s135 = sand.u32 %s52, 1
        %s136 = smul.addr %s135, 512
        %s137 = scalar_lea.vmem [#allocation5], %s136
        %s138 = smul.u32 32, %s18
        %s139 = smul.u32 32, %s18
        %v140 = vld [vmem:[%s118] sm:$0xff]
        %v141 = vld [vmem:[%s118 + $0x8] sm:$0xff]
        %v142 = vld [vmem:[%s118 + $0x10] sm:$0xff]
        %v143 = vld [vmem:[%s118 + $0x18] sm:$0xff]
        %v144 = vld [vmem:[%s118 + $0x20] sm:$0xff]
        %v145 = vld [vmem:[%s118 + $0x28] sm:$0xff]
        %v146 = vld [vmem:[%s118 + $0x30] sm:$0xff]
        %v147 = vld [vmem:[%s118 + $0x38] sm:$0xff]
        %v148 = vld [vmem:[%s118 + $0x40] sm:$0xff]
        %v149 = vld [vmem:[%s118 + $0x48] sm:$0xff]
        %v150 = vld [vmem:[%s118 + $0x50] sm:$0xff]
        %v151 = vld [vmem:[%s118 + $0x58] sm:$0xff]
        %v152 = vld [vmem:[%s118 + $0x60] sm:$0xff]
        %v153 = vld [vmem:[%s118 + $0x68] sm:$0xff]
        %v154 = vld [vmem:[%s118 + $0x70] sm:$0xff]
        %v155 = vld [vmem:[%s118 + $0x78] sm:$0xff]
        %v156 = vld [vmem:[%s118 + $0x80] sm:$0xff]
        %v157 = vld [vmem:[%s118 + $0x88] sm:$0xff]
        %v158 = vld [vmem:[%s118 + $0x90] sm:$0xff]
        %v159 = vld [vmem:[%s118 + $0x98] sm:$0xff]
        %v160 = vld [vmem:[%s118 + $0xa0] sm:$0xff]
        %v161 = vld [vmem:[%s118 + $0xa8] sm:$0xff]
        %v162 = vld [vmem:[%s118 + $0xb0] sm:$0xff]
        %v163 = vld [vmem:[%s118 + $0xb8] sm:$0xff]
        %v164 = vld [vmem:[%s118 + $0xc0] sm:$0xff]
        %v165 = vld [vmem:[%s118 + $0xc8] sm:$0xff]
        %v166 = vld [vmem:[%s118 + $0xd0] sm:$0xff]
        %v167 = vld [vmem:[%s118 + $0xd8] sm:$0xff]
        %v168 = vld [vmem:[%s118 + $0xe0] sm:$0xff]
        %v169 = vld [vmem:[%s118 + $0xe8] sm:$0xff]
        %v170 = vld [vmem:[%s118 + $0xf0] sm:$0xff]
        %v171 = vld [vmem:[%s118 + $0xf8] sm:$0xff]
        %v172 = vld [vmem:[%s118 + $0x100] sm:$0xff]
        %v173 = vld [vmem:[%s118 + $0x108] sm:$0xff]
        %v174 = vld [vmem:[%s118 + $0x110] sm:$0xff]
        %v175 = vld [vmem:[%s118 + $0x118] sm:$0xff]
        %v176 = vld [vmem:[%s118 + $0x120] sm:$0xff]
        %v177 = vld [vmem:[%s118 + $0x128] sm:$0xff]
        %v178 = vld [vmem:[%s118 + $0x130] sm:$0xff]
        %v179 = vld [vmem:[%s118 + $0x138] sm:$0xff]
        %v180 = vld [vmem:[%s118 + $0x140] sm:$0xff]
        %v181 = vld [vmem:[%s118 + $0x148] sm:$0xff]
        %v182 = vld [vmem:[%s118 + $0x150] sm:$0xff]
        %v183 = vld [vmem:[%s118 + $0x158] sm:$0xff]
        %v184 = vld [vmem:[%s118 + $0x160] sm:$0xff]
        %v185 = vld [vmem:[%s118 + $0x168] sm:$0xff]
        %v186 = vld [vmem:[%s118 + $0x170] sm:$0xff]
        %v187 = vld [vmem:[%s118 + $0x178] sm:$0xff]
        %v188 = vld [vmem:[%s118 + $0x180] sm:$0xff]
        %v189 = vld [vmem:[%s118 + $0x188] sm:$0xff]
        %v190 = vld [vmem:[%s118 + $0x190] sm:$0xff]
        %v191 = vld [vmem:[%s118 + $0x198] sm:$0xff]
        %v192 = vld [vmem:[%s118 + $0x1a0] sm:$0xff]
        %v193 = vld [vmem:[%s118 + $0x1a8] sm:$0xff]
        %v194 = vld [vmem:[%s118 + $0x1b0] sm:$0xff]
        %v195 = vld [vmem:[%s118 + $0x1b8] sm:$0xff]
        %v196 = vld [vmem:[%s118 + $0x1c0] sm:$0xff]
        %v197 = vld [vmem:[%s118 + $0x1c8] sm:$0xff]
        %v198 = vld [vmem:[%s118 + $0x1d0] sm:$0xff]
        %v199 = vld [vmem:[%s118 + $0x1d8] sm:$0xff]
        %v200 = vld [vmem:[%s118 + $0x1e0] sm:$0xff]
        %v201 = vld [vmem:[%s118 + $0x1e8] sm:$0xff]
        %v202 = vld [vmem:[%s118 + $0x1f0] sm:$0xff]
        %v203 = vld [vmem:[%s118 + $0x1f8] sm:$0xff]
        %vm204 = vcmp.ge.f32.partialorder %v140, 0.5
        %vm205 = vcmp.ge.f32.partialorder %v141, 0.5
        %vm206 = vcmp.ge.f32.partialorder %v142, 0.5
        %vm207 = vcmp.ge.f32.partialorder %v143, 0.5
        %vm208 = vcmp.ge.f32.partialorder %v144, 0.5
        %vm209 = vcmp.ge.f32.partialorder %v145, 0.5
        %vm210 = vcmp.ge.f32.partialorder %v146, 0.5
        %vm211 = vcmp.ge.f32.partialorder %v147, 0.5
        %vm212 = vcmp.ge.f32.partialorder %v148, 0.5
        %vm213 = vcmp.ge.f32.partialorder %v149, 0.5
        %vm214 = vcmp.ge.f32.partialorder %v150, 0.5
        %vm215 = vcmp.ge.f32.partialorder %v151, 0.5
        %vm216 = vcmp.ge.f32.partialorder %v152, 0.5
        %vm217 = vcmp.ge.f32.partialorder %v153, 0.5
        %vm218 = vcmp.ge.f32.partialorder %v154, 0.5
        %vm219 = vcmp.ge.f32.partialorder %v155, 0.5
        %vm220 = vcmp.ge.f32.partialorder %v156, 0.5
        %vm221 = vcmp.ge.f32.partialorder %v157, 0.5
        %vm222 = vcmp.ge.f32.partialorder %v158, 0.5
        %vm223 = vcmp.ge.f32.partialorder %v159, 0.5
        %vm224 = vcmp.ge.f32.partialorder %v160, 0.5
        %vm225 = vcmp.ge.f32.partialorder %v161, 0.5
        %vm226 = vcmp.ge.f32.partialorder %v162, 0.5
        %vm227 = vcmp.ge.f32.partialorder %v163, 0.5
        %vm228 = vcmp.ge.f32.partialorder %v164, 0.5
        %vm229 = vcmp.ge.f32.partialorder %v165, 0.5
        %vm230 = vcmp.ge.f32.partialorder %v166, 0.5
        %vm231 = vcmp.ge.f32.partialorder %v167, 0.5
        %vm232 = vcmp.ge.f32.partialorder %v168, 0.5
        %vm233 = vcmp.ge.f32.partialorder %v169, 0.5
        %vm234 = vcmp.ge.f32.partialorder %v170, 0.5
        %vm235 = vcmp.ge.f32.partialorder %v171, 0.5
        %vm236 = vcmp.ge.f32.partialorder %v172, 0.5
        %vm237 = vcmp.ge.f32.partialorder %v173, 0.5
        %vm238 = vcmp.ge.f32.partialorder %v174, 0.5
        %vm239 = vcmp.ge.f32.partialorder %v175, 0.5
        %vm240 = vcmp.ge.f32.partialorder %v176, 0.5
        %vm241 = vcmp.ge.f32.partialorder %v177, 0.5
        %vm242 = vcmp.ge.f32.partialorder %v178, 0.5
        %vm243 = vcmp.ge.f32.partialorder %v179, 0.5
        %vm244 = vcmp.ge.f32.partialorder %v180, 0.5
        %vm245 = vcmp.ge.f32.partialorder %v181, 0.5
        %vm246 = vcmp.ge.f32.partialorder %v182, 0.5
        %vm247 = vcmp.ge.f32.partialorder %v183, 0.5
        %vm248 = vcmp.ge.f32.partialorder %v184, 0.5
        %vm249 = vcmp.ge.f32.partialorder %v185, 0.5
        %vm250 = vcmp.ge.f32.partialorder %v186, 0.5
        %vm251 = vcmp.ge.f32.partialorder %v187, 0.5
        %vm252 = vcmp.ge.f32.partialorder %v188, 0.5
        %vm253 = vcmp.ge.f32.partialorder %v189, 0.5
        %vm254 = vcmp.ge.f32.partialorder %v190, 0.5
        %vm255 = vcmp.ge.f32.partialorder %v191, 0.5
        %vm256 = vcmp.ge.f32.partialorder %v192, 0.5
        %vm257 = vcmp.ge.f32.partialorder %v193, 0.5
        %vm258 = vcmp.ge.f32.partialorder %v194, 0.5
        %vm259 = vcmp.ge.f32.partialorder %v195, 0.5
        %vm260 = vcmp.ge.f32.partialorder %v196, 0.5
        %vm261 = vcmp.ge.f32.partialorder %v197, 0.5
        %vm262 = vcmp.ge.f32.partialorder %v198, 0.5
        %vm263 = vcmp.ge.f32.partialorder %v199, 0.5
        %vm264 = vcmp.ge.f32.partialorder %v200, 0.5
        %vm265 = vcmp.ge.f32.partialorder %v201, 0.5
        %vm266 = vcmp.ge.f32.partialorder %v202, 0.5
        %vm267 = vcmp.ge.f32.partialorder %v203, 0.5
        %vm268 = vcmp.lt.f32.partialorder %v140, 0.5
        %vm269 = vcmp.lt.f32.partialorder %v141, 0.5
        %vm270 = vcmp.lt.f32.partialorder %v142, 0.5
        %vm271 = vcmp.lt.f32.partialorder %v143, 0.5
        %vm272 = vcmp.lt.f32.partialorder %v144, 0.5
        %vm273 = vcmp.lt.f32.partialorder %v145, 0.5
        %vm274 = vcmp.lt.f32.partialorder %v146, 0.5
        %vm275 = vcmp.lt.f32.partialorder %v147, 0.5
        %vm276 = vcmp.lt.f32.partialorder %v148, 0.5
        %vm277 = vcmp.lt.f32.partialorder %v149, 0.5
        %vm278 = vcmp.lt.f32.partialorder %v150, 0.5
        %vm279 = vcmp.lt.f32.partialorder %v151, 0.5
        %vm280 = vcmp.lt.f32.partialorder %v152, 0.5
        %vm281 = vcmp.lt.f32.partialorder %v153, 0.5
        %vm282 = vcmp.lt.f32.partialorder %v154, 0.5
        %vm283 = vcmp.lt.f32.partialorder %v155, 0.5
        %vm284 = vcmp.lt.f32.partialorder %v156, 0.5
        %vm285 = vcmp.lt.f32.partialorder %v157, 0.5
        %vm286 = vcmp.lt.f32.partialorder %v158, 0.5
        %vm287 = vcmp.lt.f32.partialorder %v159, 0.5
        %vm288 = vcmp.lt.f32.partialorder %v160, 0.5
        %vm289 = vcmp.lt.f32.partialorder %v161, 0.5
        %vm290 = vcmp.lt.f32.partialorder %v162, 0.5
        %vm291 = vcmp.lt.f32.partialorder %v163, 0.5
        %vm292 = vcmp.lt.f32.partialorder %v164, 0.5
        %vm293 = vcmp.lt.f32.partialorder %v165, 0.5
        %vm294 = vcmp.lt.f32.partialorder %v166, 0.5
        %vm295 = vcmp.lt.f32.partialorder %v167, 0.5
        %vm296 = vcmp.lt.f32.partialorder %v168, 0.5
        %vm297 = vcmp.lt.f32.partialorder %v169, 0.5
        %vm298 = vcmp.lt.f32.partialorder %v170, 0.5
        %vm299 = vcmp.lt.f32.partialorder %v171, 0.5
        %vm300 = vcmp.lt.f32.partialorder %v172, 0.5
        %vm301 = vcmp.lt.f32.partialorder %v173, 0.5
        %vm302 = vcmp.lt.f32.partialorder %v174, 0.5
        %vm303 = vcmp.lt.f32.partialorder %v175, 0.5
        %vm304 = vcmp.lt.f32.partialorder %v176, 0.5
        %vm305 = vcmp.lt.f32.partialorder %v177, 0.5
        %vm306 = vcmp.lt.f32.partialorder %v178, 0.5
        %vm307 = vcmp.lt.f32.partialorder %v179, 0.5
        %vm308 = vcmp.lt.f32.partialorder %v180, 0.5
        %vm309 = vcmp.lt.f32.partialorder %v181, 0.5
        %vm310 = vcmp.lt.f32.partialorder %v182, 0.5
        %vm311 = vcmp.lt.f32.partialorder %v183, 0.5
        %vm312 = vcmp.lt.f32.partialorder %v184, 0.5
        %vm313 = vcmp.lt.f32.partialorder %v185, 0.5
        %vm314 = vcmp.lt.f32.partialorder %v186, 0.5
        %vm315 = vcmp.lt.f32.partialorder %v187, 0.5
        %vm316 = vcmp.lt.f32.partialorder %v188, 0.5
        %vm317 = vcmp.lt.f32.partialorder %v189, 0.5
        %vm318 = vcmp.lt.f32.partialorder %v190, 0.5
        %vm319 = vcmp.lt.f32.partialorder %v191, 0.5
        %vm320 = vcmp.lt.f32.partialorder %v192, 0.5
        %vm321 = vcmp.lt.f32.partialorder %v193, 0.5
        %vm322 = vcmp.lt.f32.partialorder %v194, 0.5
        %vm323 = vcmp.lt.f32.partialorder %v195, 0.5
        %vm324 = vcmp.lt.f32.partialorder %v196, 0.5
        %vm325 = vcmp.lt.f32.partialorder %v197, 0.5
        %vm326 = vcmp.lt.f32.partialorder %v198, 0.5
        %vm327 = vcmp.lt.f32.partialorder %v199, 0.5
        %vm328 = vcmp.lt.f32.partialorder %v200, 0.5
        %vm329 = vcmp.lt.f32.partialorder %v201, 0.5
        %vm330 = vcmp.lt.f32.partialorder %v202, 0.5
        %vm331 = vcmp.lt.f32.partialorder %v203, 0.5
        %v332 = vsel %vm268, 0.0, %v140
        %v333 = vsel %vm269, 0.0, %v141
        %v334 = vsel %vm270, 0.0, %v142
        %v335 = vsel %vm271, 0.0, %v143
        %v336 = vsel %vm272, 0.0, %v144
        %v337 = vsel %vm273, 0.0, %v145
        %v338 = vsel %vm274, 0.0, %v146
        %v339 = vsel %vm275, 0.0, %v147
        %v340 = vsel %vm276, 0.0, %v148
        %v341 = vsel %vm277, 0.0, %v149
        %v342 = vsel %vm278, 0.0, %v150
        %v343 = vsel %vm279, 0.0, %v151
        %v344 = vsel %vm280, 0.0, %v152
        %v345 = vsel %vm281, 0.0, %v153
        %v346 = vsel %vm282, 0.0, %v154
        %v347 = vsel %vm283, 0.0, %v155
        %v348 = vsel %vm284, 0.0, %v156
        %v349 = vsel %vm285, 0.0, %v157
        %v350 = vsel %vm286, 0.0, %v158
        %v351 = vsel %vm287, 0.0, %v159
        %v352 = vsel %vm288, 0.0, %v160
        %v353 = vsel %vm289, 0.0, %v161
        %v354 = vsel %vm290, 0.0, %v162
        %v355 = vsel %vm291, 0.0, %v163
        %v356 = vsel %vm292, 0.0, %v164
        %v357 = vsel %vm293, 0.0, %v165
        %v358 = vsel %vm294, 0.0, %v166
        %v359 = vsel %vm295, 0.0, %v167
        %v360 = vsel %vm296, 0.0, %v168
        %v361 = vsel %vm297, 0.0, %v169
        %v362 = vsel %vm298, 0.0, %v170
        %v363 = vsel %vm299, 0.0, %v171
        %v364 = vsel %vm300, 0.0, %v172
        %v365 = vsel %vm301, 0.0, %v173
        %v366 = vsel %vm302, 0.0, %v174
        %v367 = vsel %vm303, 0.0, %v175
        %v368 = vsel %vm304, 0.0, %v176
        %v369 = vsel %vm305, 0.0, %v177
        %v370 = vsel %vm306, 0.0, %v178
        %v371 = vsel %vm307, 0.0, %v179
        %v372 = vsel %vm308, 0.0, %v180
        %v373 = vsel %vm309, 0.0, %v181
        %v374 = vsel %vm310, 0.0, %v182
        %v375 = vsel %vm311, 0.0, %v183
        %v376 = vsel %vm312, 0.0, %v184
        %v377 = vsel %vm313, 0.0, %v185
        %v378 = vsel %vm314, 0.0, %v186
        %v379 = vsel %vm315, 0.0, %v187
        %v380 = vsel %vm316, 0.0, %v188
        %v381 = vsel %vm317, 0.0, %v189
        %v382 = vsel %vm318, 0.0, %v190
        %v383 = vsel %vm319, 0.0, %v191
        %v384 = vsel %vm320, 0.0, %v192
        %v385 = vsel %vm321, 0.0, %v193
        %v386 = vsel %vm322, 0.0, %v194
        %v387 = vsel %vm323, 0.0, %v195
        %v388 = vsel %vm324, 0.0, %v196
        %v389 = vsel %vm325, 0.0, %v197
        %v390 = vsel %vm326, 0.0, %v198
        %v391 = vsel %vm327, 0.0, %v199
        %v392 = vsel %vm328, 0.0, %v200
        %v393 = vsel %vm329, 0.0, %v201
        %v394 = vsel %vm330, 0.0, %v202
        %v395 = vsel %vm331, 0.0, %v203
        %v396 = vsel %vm204, 1.0, %v332
        %v397 = vsel %vm205, 1.0, %v333
        %v398 = vsel %vm206, 1.0, %v334
        %v399 = vsel %vm207, 1.0, %v335
        %v400 = vsel %vm208, 1.0, %v336
        %v401 = vsel %vm209, 1.0, %v337
        %v402 = vsel %vm210, 1.0, %v338
        %v403 = vsel %vm211, 1.0, %v339
        %v404 = vsel %vm212, 1.0, %v340
        %v405 = vsel %vm213, 1.0, %v341
        %v406 = vsel %vm214, 1.0, %v342
        %v407 = vsel %vm215, 1.0, %v343
        %v408 = vsel %vm216, 1.0, %v344
        %v409 = vsel %vm217, 1.0, %v345
        %v410 = vsel %vm218, 1.0, %v346
        %v411 = vsel %vm219, 1.0, %v347
        %v412 = vsel %vm220, 1.0, %v348
        %v413 = vsel %vm221, 1.0, %v349
        %v414 = vsel %vm222, 1.0, %v350
        %v415 = vsel %vm223, 1.0, %v351
        %v416 = vsel %vm224, 1.0, %v352
        %v417 = vsel %vm225, 1.0, %v353
        %v418 = vsel %vm226, 1.0, %v354
        %v419 = vsel %vm227, 1.0, %v355
        %v420 = vsel %vm228, 1.0, %v356
        %v421 = vsel %vm229, 1.0, %v357
        %v422 = vsel %vm230, 1.0, %v358
        %v423 = vsel %vm231, 1.0, %v359
        %v424 = vsel %vm232, 1.0, %v360
        %v425 = vsel %vm233, 1.0, %v361
        %v426 = vsel %vm234, 1.0, %v362
        %v427 = vsel %vm235, 1.0, %v363
        %v428 = vsel %vm236, 1.0, %v364
        %v429 = vsel %vm237, 1.0, %v365
        %v430 = vsel %vm238, 1.0, %v366
        %v431 = vsel %vm239, 1.0, %v367
        %v432 = vsel %vm240, 1.0, %v368
        %v433 = vsel %vm241, 1.0, %v369
        %v434 = vsel %vm242, 1.0, %v370
        %v435 = vsel %vm243, 1.0, %v371
        %v436 = vsel %vm244, 1.0, %v372
        %v437 = vsel %vm245, 1.0, %v373
        %v438 = vsel %vm246, 1.0, %v374
        %v439 = vsel %vm247, 1.0, %v375
        %v440 = vsel %vm248, 1.0, %v376
        %v441 = vsel %vm249, 1.0, %v377
        %v442 = vsel %vm250, 1.0, %v378
        %v443 = vsel %vm251, 1.0, %v379
        %v444 = vsel %vm252, 1.0, %v380
        %v445 = vsel %vm253, 1.0, %v381
        %v446 = vsel %vm254, 1.0, %v382
        %v447 = vsel %vm255, 1.0, %v383
        %v448 = vsel %vm256, 1.0, %v384
        %v449 = vsel %vm257, 1.0, %v385
        %v450 = vsel %vm258, 1.0, %v386
        %v451 = vsel %vm259, 1.0, %v387
        %v452 = vsel %vm260, 1.0, %v388
        %v453 = vsel %vm261, 1.0, %v389
        %v454 = vsel %vm262, 1.0, %v390
        %v455 = vsel %vm263, 1.0, %v391
        %v456 = vsel %vm264, 1.0, %v392
        %v457 = vsel %vm265, 1.0, %v393
        %v458 = vsel %vm266, 1.0, %v394
        %v459 = vsel %vm267, 1.0, %v395
        %460 = vst [vmem:[%s137] sm:$0xff] %v396
        %461 = vst [vmem:[%s137 + $0x8] sm:$0xff] %v397
        %462 = vst [vmem:[%s137 + $0x10] sm:$0xff] %v398
        %463 = vst [vmem:[%s137 + $0x18] sm:$0xff] %v399
        %464 = vst [vmem:[%s137 + $0x20] sm:$0xff] %v400
        %465 = vst [vmem:[%s137 + $0x28] sm:$0xff] %v401
        %466 = vst [vmem:[%s137 + $0x30] sm:$0xff] %v402
        %467 = vst [vmem:[%s137 + $0x38] sm:$0xff] %v403
        %468 = vst [vmem:[%s137 + $0x40] sm:$0xff] %v404
        %469 = vst [vmem:[%s137 + $0x48] sm:$0xff] %v405
        %470 = vst [vmem:[%s137 + $0x50] sm:$0xff] %v406
        %471 = vst [vmem:[%s137 + $0x58] sm:$0xff] %v407
        %472 = vst [vmem:[%s137 + $0x60] sm:$0xff] %v408
        %473 = vst [vmem:[%s137 + $0x68] sm:$0xff] %v409
        %474 = vst [vmem:[%s137 + $0x70] sm:$0xff] %v410
        %475 = vst [vmem:[%s137 + $0x78] sm:$0xff] %v411
        %476 = vst [vmem:[%s137 + $0x80] sm:$0xff] %v412
        %477 = vst [vmem:[%s137 + $0x88] sm:$0xff] %v413
        %478 = vst [vmem:[%s137 + $0x90] sm:$0xff] %v414
        %479 = vst [vmem:[%s137 + $0x98] sm:$0xff] %v415
        %480 = vst [vmem:[%s137 + $0xa0] sm:$0xff] %v416
        %481 = vst [vmem:[%s137 + $0xa8] sm:$0xff] %v417
        %482 = vst [vmem:[%s137 + $0xb0] sm:$0xff] %v418
        %483 = vst [vmem:[%s137 + $0xb8] sm:$0xff] %v419
        %484 = vst [vmem:[%s137 + $0xc0] sm:$0xff] %v420
        %485 = vst [vmem:[%s137 + $0xc8] sm:$0xff] %v421
        %486 = vst [vmem:[%s137 + $0xd0] sm:$0xff] %v422
        %487 = vst [vmem:[%s137 + $0xd8] sm:$0xff] %v423
        %488 = vst [vmem:[%s137 + $0xe0] sm:$0xff] %v424
        %489 = vst [vmem:[%s137 + $0xe8] sm:$0xff] %v425
        %490 = vst [vmem:[%s137 + $0xf0] sm:$0xff] %v426
        %491 = vst [vmem:[%s137 + $0xf8] sm:$0xff] %v427
        %492 = vst [vmem:[%s137 + $0x100] sm:$0xff] %v428
        %493 = vst [vmem:[%s137 + $0x108] sm:$0xff] %v429
        %494 = vst [vmem:[%s137 + $0x110] sm:$0xff] %v430
        %495 = vst [vmem:[%s137 + $0x118] sm:$0xff] %v431
        %496 = vst [vmem:[%s137 + $0x120] sm:$0xff] %v432
        %497 = vst [vmem:[%s137 + $0x128] sm:$0xff] %v433
        %498 = vst [vmem:[%s137 + $0x130] sm:$0xff] %v434
        %499 = vst [vmem:[%s137 + $0x138] sm:$0xff] %v435
        %500 = vst [vmem:[%s137 + $0x140] sm:$0xff] %v436
        %501 = vst [vmem:[%s137 + $0x148] sm:$0xff] %v437
        %502 = vst [vmem:[%s137 + $0x150] sm:$0xff] %v438
        %503 = vst [vmem:[%s137 + $0x158] sm:$0xff] %v439
        %504 = vst [vmem:[%s137 + $0x160] sm:$0xff] %v440
        %505 = vst [vmem:[%s137 + $0x168] sm:$0xff] %v441
        %506 = vst [vmem:[%s137 + $0x170] sm:$0xff] %v442
        %507 = vst [vmem:[%s137 + $0x178] sm:$0xff] %v443
        %508 = vst [vmem:[%s137 + $0x180] sm:$0xff] %v444
        %509 = vst [vmem:[%s137 + $0x188] sm:$0xff] %v445
        %510 = vst [vmem:[%s137 + $0x190] sm:$0xff] %v446
        %511 = vst [vmem:[%s137 + $0x198] sm:$0xff] %v447
        %512 = vst [vmem:[%s137 + $0x1a0] sm:$0xff] %v448
        %513 = vst [vmem:[%s137 + $0x1a8] sm:$0xff] %v449
        %514 = vst [vmem:[%s137 + $0x1b0] sm:$0xff] %v450
        %515 = vst [vmem:[%s137 + $0x1b8] sm:$0xff] %v451
        %516 = vst [vmem:[%s137 + $0x1c0] sm:$0xff] %v452
        %517 = vst [vmem:[%s137 + $0x1c8] sm:$0xff] %v453
        %518 = vst [vmem:[%s137 + $0x1d0] sm:$0xff] %v454
        %519 = vst [vmem:[%s137 + $0x1d8] sm:$0xff] %v455
        %520 = vst [vmem:[%s137 + $0x1e0] sm:$0xff] %v456
        %521 = vst [vmem:[%s137 + $0x1e8] sm:$0xff] %v457
        %522 = vst [vmem:[%s137 + $0x1f0] sm:$0xff] %v458
        %523 = vst [vmem:[%s137 + $0x1f8] sm:$0xff] %v459
        %s524 = sand.u32 %s52, 1
        %s525 = scalar_lea.sflag [#allocation4], %s524
        %s526 = sand.u32 %s52, 1
        %s527 = smul.addr %s526, 512
        %s528 = scalar_lea.vmem [#allocation5], %s527
        // Predicated region
        $region29: #{tpu_custom_call.1} parent=23 // pred_check
          %p529 = pneg %p62
        $region30: #{tpu_custom_call.1} parent=23 // pred_check_branch
          %531 = sbr.rel (%p529) target = $region32
        $region31: #{tpu_custom_call.1} parent=23 // pred_region
          %s532 = smul.u32 32, %s18
          %534 = vsyncadd %s525, 0
          %s535 = smul.addr %s532, 2
          %s536 = smul.addr %s535, 8
          %s537 = scalar_lea.hbm %s1, %s536
          %s538 = sshll.u32 %s528, 4
          %s539 = int_to_ptr.vmem [resolvable:$true] %s538
          %s540 = sshll.u32 %s537, 4
          %s541 = int_to_ptr.hbm [resolvable:$true] %s540
          %546 = dma.vmem_to_hbm [thread:$0]  %s539, 8192, %s541, %s525, 256, 256, 16
        $region32: #{tpu_custom_call.1} parent=23 // pred_fallthru
          _
      $region24: #{tpu_custom_call.1} parent=5 // pred_fallthru
        _
      %p547 = scmp.le.s32.totalorder 2, %s13
      // Predicated region
      $region33: #{tpu_custom_call.1} parent=5 // pred_check
        %p548 = pneg %p547
      $region34: #{tpu_custom_call.1} parent=5 // pred_check_branch
        %550 = sbr.rel (%p548) target = $region36
      $region35: #{tpu_custom_call.1} parent=5 // pred_region
        %s551 = ssub.s32 %s13, 2
        // Predicated region
        $region37: #{tpu_custom_call.1} parent=35 // pred_check
          %p552 = pneg %p68
        $region38: #{tpu_custom_call.1} parent=35 // pred_check_branch
          %554 = sbr.rel (%p552) target = $region40
        $region39: #{tpu_custom_call.1} parent=35 // pred_region
          %s555 = sand.u32 %s53, 1
          %s556 = scalar_lea.sflag [#allocation4], %s555
          %s557 = sand.u32 %s53, 1
          %s558 = smul.addr %s557, 512
          %s559 = scalar_lea.vmem [#allocation5], %s558
          %561 = dma.done %s556, 8192
        $region40: #{tpu_custom_call.1} parent=35 // pred_fallthru
          _
      $region36: #{tpu_custom_call.1} parent=5 // pred_fallthru
        _
    $region6: #{tpu_custom_call.1} parent=1 // loop_footer
      %s17 = sadd.s32 1, %s13
    $region7: #{tpu_custom_call.1} parent=1 // loop_footer_branch
      %12 = sbr.rel target = $region3
    $region8: #{tpu_custom_call.1} parent=1 // loop_exit
      _
    %562 = vsyncpa [#allocation3], 1
    %s563 = scalar_lea.sflag [#allocation3], 1
    %564 = vsyncpa %s563, 1
    %565 = vsyncpa [#allocation4], 1
    %s566 = scalar_lea.sflag [#allocation4], 1
    %567 = vsyncpa %s566, 1

</llo_original>
